<compile_context>
chip_gen: v7x
topology: tpu7x:2x2x1
jax: 0.10.0
libtpu: 0.0.40
codegen_flags: <defaults>
</compile_context>

<pallas_src>
import functools

import jax
import jax.numpy as jnp
from jax.experimental import pallas as pl
from jax.experimental.pallas import tpu as pltpu

_LANE = 128
_RESEED_EVERY = 3  # re-seed the double-angle recurrence with exact sin/cos


def _posenc_kernel(x_ref, o_ref, *, num_freqs, include_input):
    # x_ref: (C, TN) VMEM tile; o_ref: (C_enc, TN) VMEM tile.
    # Compute in f32 (v5e VPU/EUP have no bf16 path); cast at each store.
    x = x_ref[...].astype(jnp.float32)
    C = x_ref.shape[0]

    # Flush groups of consecutive parts sized to roughly one sublane tile
    # (8 rows for 32-bit output, 16 for 16-bit) so stores stay dense while
    # only a couple of parts are live at any time (no vreg spills).
    itemsize = jnp.dtype(o_ref.dtype).itemsize
    target_rows = 8 * max(1, 4 // itemsize)
    parts_per_chunk = max(1, -(-target_rows // C))

    state = {"pending": [], "rows": 0, "off": 0}

    def _flush():
        if not state["pending"]:
            return
        if len(state["pending"]) == 1:
            chunk = state["pending"][0]
        else:
            chunk = jnp.concatenate(state["pending"], axis=0)
        off = state["off"]          # static Python int -> static slice
        rows = state["rows"]
        o_ref[pl.ds(off, rows), :] = chunk.astype(o_ref.dtype)
        state["off"] = off + rows
        state["pending"] = []
        state["rows"] = 0

    def _emit(part):
        state["pending"].append(part)
        state["rows"] += C
        if len(state["pending"]) >= parts_per_chunk:
            _flush()

    if include_input:
        _emit(x)
    if num_freqs > 0:
        # Frequency bands are exact powers of two -> double-angle recurrence:
        #   sin(2t) = 2 sin t cos t,  cos(2t) = 1 - 2 sin^2 t
        # with an exact jnp.sin/jnp.cos re-seed every _RESEED_EVERY doublings
        # to keep rounding error bounded at large num_freqs.
        s = jnp.sin(x)
        c = jnp.cos(x)
        _emit(s)
        _emit(c)
        for i in range(1, num_freqs):
            if _RESEED_EVERY and (i % _RESEED_EVERY == 0):
                xi = x * jnp.float32(2.0 ** i)
                s = jnp.sin(xi)
                c = jnp.cos(xi)
            else:
                s, c = 2.0 * s * c, 1.0 - 2.0 * s * s
            _emit(s)
            _emit(c)
    _flush()


def _round_up(v, m):
    return ((v + m - 1) // m) * m


def _chip_params():
    """Generation-aware tiling knobs.  Unknown chips fall back to the
    conservative (v7x-safe) settings."""
    kind = ""
    try:
        kind = jax.devices()[0].device_kind.lower()
    except Exception:
        pass
    is_v7 = ("v7" in kind) or ("7x" in kind)
    is_pre_v7 = (not is_v7) and any(
        t in kind for t in ("v2", "v3", "v4", "v5", "v6"))
    if is_pre_v7:
        # 128 MiB physical VMEM, single TensorCore: big tiles, no grid split.
        return {"block_budget": 28 << 20, "vmem_cap": 100 << 20, "min_steps": 1}
    # v7x (or unknown): 64 MiB physical VMEM, 2 TensorCores.
    return {"block_budget": 10 << 20, "vmem_cap": 48 << 20, "min_steps": 4}


def _choose_tile_n(N, C, C_enc, itemsize, block_budget, min_steps):
    """Largest lane-multiple tile whose double-buffered in+out blocks fit the
    per-generation VMEM block budget, capped at 2048 lanes.  Only shrink for
    multi-TC grid sharding (v7x), and never below 512 lanes per step."""
    per_lane = 2 * (C + C_enc) * itemsize      # double-buffered in+out column
    max_tn = max(_LANE, (block_budget // per_lane) // _LANE * _LANE)
    tn = min(2048, max_tn)
    if min_steps > 1:
        per_step = max(512, _round_up(pl.cdiv(N, min_steps), _LANE))
        tn = min(tn, per_step)
    # Never allocate blocks wider than the (lane-rounded) problem.
    tn = min(tn, _round_up(N, _LANE))
    return max(_LANE, tn)


def pos_enc(x, num_freqs, include_input=True):
    C, H, W = x.shape
    n_parts = (1 if include_input else 0) + 2 * num_freqs
    C_enc = C * n_parts
    N = H * W
    itemsize = jnp.dtype(x.dtype).itemsize

    # Input-side spatial permute (cheap: input is (1+2F)x smaller than the
    # output).  Column n = w*H + h holds x[:, h, w], so the kernel output
    # (C_enc, N) reshapes straight to the PyTorch (C_enc, W, H) layout.
    # TODO(synk): the small wrapper transpose could be folded in-kernel via an
    # XLU transpose of (C, H, tw) tiles when F is small; low priority.
    x2 = x.transpose(0, 2, 1).reshape(C, N)

    chip = _chip_params()
    tn = _choose_tile_n(N, C, C_enc, itemsize,
                        chip["block_budget"], chip["min_steps"])
    grid_n = pl.cdiv(N, tn)   # partial last block is masked by Pallas

    vmem_need = 2 * (C + C_enc) * tn * itemsize   # double-buffered in+out blocks
    vmem_limit = int(min(chip["vmem_cap"], max(4 * vmem_need, 16 << 20)))

    cost = pl.CostEstimate(
        flops=int(5 * C * N * max(num_freqs, 1)),
        transcendentals=int(2 * C * N * (1 + num_freqs // max(_RESEED_EVERY, 1))),
        bytes_accessed=int((C + C_enc) * N * itemsize),
    )

    kernel = functools.partial(
        _posenc_kernel, num_freqs=num_freqs, include_input=include_input)

    enc = pl.pallas_call(
        kernel,
        out_shape=jax.ShapeDtypeStruct((C_enc, N), x.dtype),
        grid_spec=pltpu.PrefetchScalarGridSpec(
            num_scalar_prefetch=0,
            grid=(grid_n,),
            in_specs=[pl.BlockSpec((C, tn), lambda i: (0, i))],
            out_specs=pl.BlockSpec((C_enc, tn), lambda i: (0, i)),
        ),
        compiler_params=pltpu.CompilerParams(
            dimension_semantics=("parallel",),
            vmem_limit_bytes=vmem_limit,
        ),
        cost_estimate=cost,
    )(x2)

    return enc.reshape(C_enc, W, H)


def pos_enc_reference(x, num_freqs, include_input=True):
    """Pure-JAX transcription of the PyTorch forward for validation."""
    C, H, W = x.shape
    xf = x.transpose(1, 2, 0).reshape(-1, C)
    parts = []
    if include_input:
        parts.append(xf)
    for i in range(num_freqs):
        f = 2.0 ** i
        parts.append(jnp.sin(f * xf))
        parts.append(jnp.cos(f * xf))
    enc = jnp.concatenate(parts, axis=-1)
    return enc.reshape(H, W, -1).transpose(2, 1, 0)


if __name__ == "__main__":
    key = jax.random.PRNGKey(0)

    # Test 1: typical shape, N divisible by 128.
    C, H, W = 4, 16, 16
    num_freqs = 4
    x = jax.random.normal(key, (C, H, W), dtype=jnp.float32)
    out = jax.block_until_ready(pos_enc(x, num_freqs, include_input=True))
    ref = pos_enc_reference(x, num_freqs, include_input=True)
    assert out.shape == (C * (1 + 2 * num_freqs), W, H), out.shape
    assert jnp.allclose(out, ref, atol=5e-5, rtol=1e-5), float(
        jnp.max(jnp.abs(out - ref)))

    # Test 2: ragged spatial size (exercises the masked partial-block path),
    # non-power-of-two C, include_input=False.
    C2, H2, W2 = 3, 10, 7
    nf2 = 3
    x_r = jax.random.normal(jax.random.PRNGKey(1), (C2, H2, W2),
                            dtype=jnp.float32)
    out2 = jax.block_until_ready(pos_enc(x_r, nf2, include_input=False))
    ref2 = pos_enc_reference(x_r, nf2, include_input=False)
    assert out2.shape == (C2 * 2 * nf2, W2, H2), out2.shape
    assert jnp.allclose(out2, ref2, atol=5e-5, rtol=1e-5), float(
        jnp.max(jnp.abs(out2 - ref2)))

    # Test 3: larger ragged N with many frequencies (reseed path) to check
    # the recurrence + chunked-store accuracy at F=10.
    C3, H3, W3 = 4, 30, 22
    nf3 = 10
    x3 = jax.random.normal(jax.random.PRNGKey(2), (C3, H3, W3),
                           dtype=jnp.float32)
    out3 = jax.block_until_ready(pos_enc(x3, nf3, include_input=True))
    ref3 = pos_enc_reference(x3, nf3, include_input=True)
    assert out3.shape == (C3 * (1 + 2 * nf3), W3, H3), out3.shape
    assert jnp.allclose(out3, ref3, atol=2e-4, rtol=1e-4), float(
        jnp.max(jnp.abs(out3 - ref3)))

    print("KERNEL_OK")
</pallas_src>

<mosaic_0001>
module attributes {stable_mosaic.version = 11 : i64} {
  func.func @_posenc_kernel(%arg0: i32, %arg1: memref<4x256xf32, #tpu.memory_space<vmem>>, %arg2: memref<36x256xf32, #tpu.memory_space<vmem>>) attributes {dimension_semantics = [#tpu.dimension_semantics<parallel>], iteration_bounds = array<i64: 1>, scalar_prefetch = 0 : i64, scratch_operands = 0 : i64, tpu.core_type = #tpu.core_type<tc>, window_params = [{transform_indices = @transform_0, window_bounds = array<i64: 4, 256>}, {transform_indices = @transform_1, window_bounds = array<i64: 36, 256>}]} {
    %c0 = arith.constant 0 : index
    %c0_0 = arith.constant 0 : index
    %0 = vector.load %arg1[%c0, %c0_0] : memref<4x256xf32, #tpu.memory_space<vmem>>, vector<4x256xf32>
    %1 = math.sin %0 : vector<4x256xf32>
    %2 = math.cos %0 : vector<4x256xf32>
    %3 = tpu.concatenate %0, %1 in 0 : vector<4x256xf32>, vector<4x256xf32> -> vector<8x256xf32>
    %c0_1 = arith.constant 0 : index
    %c0_2 = arith.constant 0 : index
    %4 = vector.load %arg2[%c0_1, %c0_2] : memref<36x256xf32, #tpu.memory_space<vmem>>, vector<8x256xf32>
    tpu.vector_store %arg2[%c0_1, %c0_2], %3 {strides = array<i32>} : memref<36x256xf32, #tpu.memory_space<vmem>>, vector<8x256xf32>,
    %cst = arith.constant 2.000000e+00 : f32
    %5 = vector.broadcast %cst : f32 to vector<4x256xf32>
    %6 = arith.mulf %5, %1 : vector<4x256xf32>
    %7 = arith.mulf %6, %2 : vector<4x256xf32>
    %cst_3 = arith.constant 2.000000e+00 : f32
    %8 = vector.broadcast %cst_3 : f32 to vector<4x256xf32>
    %9 = arith.mulf %8, %1 : vector<4x256xf32>
    %10 = arith.mulf %9, %1 : vector<4x256xf32>
    %cst_4 = arith.constant 1.000000e+00 : f32
    %11 = vector.broadcast %cst_4 : f32 to vector<4x256xf32>
    %12 = arith.subf %11, %10 : vector<4x256xf32>
    %13 = tpu.concatenate %2, %7 in 0 : vector<4x256xf32>, vector<4x256xf32> -> vector<8x256xf32>
    %c8 = arith.constant 8 : index
    %c0_5 = arith.constant 0 : index
    %14 = vector.load %arg2[%c8, %c0_5] : memref<36x256xf32, #tpu.memory_space<vmem>>, vector<8x256xf32>
    tpu.vector_store %arg2[%c8, %c0_5], %13 {strides = array<i32>} : memref<36x256xf32, #tpu.memory_space<vmem>>, vector<8x256xf32>,
    %cst_6 = arith.constant 2.000000e+00 : f32
    %15 = vector.broadcast %cst_6 : f32 to vector<4x256xf32>
    %16 = arith.mulf %15, %7 : vector<4x256xf32>
    %17 = arith.mulf %16, %12 : vector<4x256xf32>
    %cst_7 = arith.constant 2.000000e+00 : f32
    %18 = vector.broadcast %cst_7 : f32 to vector<4x256xf32>
    %19 = arith.mulf %18, %7 : vector<4x256xf32>
    %20 = arith.mulf %19, %7 : vector<4x256xf32>
    %cst_8 = arith.constant 1.000000e+00 : f32
    %21 = vector.broadcast %cst_8 : f32 to vector<4x256xf32>
    %22 = arith.subf %21, %20 : vector<4x256xf32>
    %23 = tpu.concatenate %12, %17 in 0 : vector<4x256xf32>, vector<4x256xf32> -> vector<8x256xf32>
    %c16 = arith.constant 16 : index
    %c0_9 = arith.constant 0 : index
    %24 = vector.load %arg2[%c16, %c0_9] : memref<36x256xf32, #tpu.memory_space<vmem>>, vector<8x256xf32>
    tpu.vector_store %arg2[%c16, %c0_9], %23 {strides = array<i32>} : memref<36x256xf32, #tpu.memory_space<vmem>>, vector<8x256xf32>,
    %cst_10 = arith.constant 8.000000e+00 : f32
    %25 = vector.broadcast %cst_10 : f32 to vector<4x256xf32>
    %26 = arith.mulf %0, %25 : vector<4x256xf32>
    %27 = math.sin %26 : vector<4x256xf32>
    %28 = math.cos %26 : vector<4x256xf32>
    %29 = tpu.concatenate %22, %27 in 0 : vector<4x256xf32>, vector<4x256xf32> -> vector<8x256xf32>
    %c24 = arith.constant 24 : index
    %c0_11 = arith.constant 0 : index
    %30 = vector.load %arg2[%c24, %c0_11] : memref<36x256xf32, #tpu.memory_space<vmem>>, vector<8x256xf32>
    tpu.vector_store %arg2[%c24, %c0_11], %29 {strides = array<i32>} : memref<36x256xf32, #tpu.memory_space<vmem>>, vector<8x256xf32>,
    %c32 = arith.constant 32 : index
    %c0_12 = arith.constant 0 : index
    %31 = vector.load %arg2[%c32, %c0_12] : memref<36x256xf32, #tpu.memory_space<vmem>>, vector<4x256xf32>
    tpu.vector_store %arg2[%c32, %c0_12], %28 {strides = array<i32>} : memref<36x256xf32, #tpu.memory_space<vmem>>, vector<4x256xf32>,
    return
  }
  func.func @transform_0(%arg0: i32) -> (i32, i32) {
    %c0_i32 = arith.constant 0 : i32
    %c0_i32_0 = arith.constant 0 : i32
    return %c0_i32, %arg0 : i32, i32
  }
  func.func @transform_1(%arg0: i32) -> (i32, i32) {
    %c0_i32 = arith.constant 0 : i32
    %c0_i32_0 = arith.constant 0 : i32
    return %c0_i32, %arg0 : i32, i32
  }
}

</mosaic_0001>

<llo_original>
// kernel: tpu_custom_call.1
$region0: #{tpu_custom_call.1}
  #allocation0 [shape = 'u32[]', space=smem, size = 0x4, offset = 0x4, fixed_abs, tag = 'smem constant byte address 0x4 - core index']
  #allocation1 [shape = 'u32[144,128]{1,0:T(1,128)}', space=vmem, size = 0x12000, scoped, tag = 'internal scratch']
  %s0 = inlined_call_operand.hbm [shape: f32[4,256], index: 0, kind: input, shape index: {}]
  %s1 = inlined_call_operand.hbm [shape: f32[36,256], index: 1, kind: output, shape index: {}]
  %s2 = sld [smem:[#allocation0]]
  $region18: #{tpu_custom_call.1} parent=0
    _
  %s4 = ssub.s32 1, %s2
  %s5 = scalar_select 0, %s4, %s2
  $region1: #{tpu_custom_call.1} parent=0
    #allocation2 [shape = 'u8[4096]{0}', space=vmem, size = 0x1000, scoped, tag = 'input window, operand 0, single buffered']
    #allocation3 [shape = 's32[1]{0}', space=sflag, size = 0x4, scoped, tag = 'scoped memory for tpu_custom_call.1']
    #allocation4 [shape = 's32[1]{0}', space=sflag, size = 0x4, scoped, tag = 'scoped memory for tpu_custom_call.1']
    #allocation5 [shape = 'u8[40960]{0}', space=vmem, size = 0xa000, scoped, tag = 'output window, operand 0, single buffered']
    %6 = vsyncpa [#allocation3], 0
    %7 = vsyncpa [#allocation4], 0
    // Predicated region
    $region2: #{tpu_custom_call.1} parent=1 // pred_check
      _
    $region3: #{tpu_custom_call.1} parent=1 // pred_check_branch
      %9 = sbr.rel (0) target = $region5
    $region4: #{tpu_custom_call.1} parent=1 // pred_region
      %s11 = ssub.s32 128, 128
      %12 = vsyncadd [#allocation3], %s11
      %s14 = sshll.u32 [#allocation2], 4
      %s15 = int_to_ptr.vmem [resolvable:$true] %s14
      %17 = dma.hbm_to_vmem [thread:$0]  %s0, 128, %s15, [#allocation3]
    $region5: #{tpu_custom_call.1} parent=1 // pred_fallthru
      _
    // Predicated region
    $region6: #{tpu_custom_call.1} parent=1 // pred_check
      _
    $region7: #{tpu_custom_call.1} parent=1 // pred_check_branch
      %19 = sbr.rel (0) target = $region9
    $region8: #{tpu_custom_call.1} parent=1 // pred_region
      %20 = dma.done [#allocation3], 128
    $region9: #{tpu_custom_call.1} parent=1 // pred_fallthru
      _
    %v21 = vld [vmem:[#allocation2] sm:$0xff]
    %v22 = vand.u32 2147483647, %v21
    %vm23 = vcmp.le.f32.partialorder %v22, 0.7853982
    %vm24 = vcmp.lt.s32.totalorder %v21, 0
    %v25 = vand.u32 %v21, 2139095040
    %v26 = vshrl.u32 %v25, 23
    %v27 = vsub.s32 %v26, 127
    %v28 = vand.u32 2147483647, %v21
    %v29 = vand.u32 %v28, 8388607
    %v30 = vor.u32 %v29, 8388608
    %v31 = vsub.s32 0, %v30
    %v32 = vadd.s32 %v27, 1
    %vm33 = vcmp.gt.s32.totalorder %v32, 0
    %v34 = vsel %vm33, %v32, 0
    %v35 = vshrl.u32 %v34, 5
    %v36 = vand.u32 %v34, 31
    %v37 = vsub.s32 32, %v36
    %v38 = vshrl.u32 683565275, %v37
    %v39 = vshll.u32 683565275, %v36
    %v40 = vshrl.u32 2475754826, %v37
    %v41 = vor.u32 %v39, %v40
    %v42 = vshll.u32 2475754826, %v36
    %v43 = vshrl.u32 2131351028, %v37
    %v44 = vor.u32 %v42, %v43
    %v45 = vshll.u32 2131351028, %v36
    %v46 = vshrl.u32 2102212464, %v37
    %v47 = vor.u32 %v45, %v46
    %v48 = vshll.u32 2102212464, %v36
    %v49 = vshrl.u32 920167782, %v37
    %v50 = vor.u32 %v48, %v49
    %v51 = vshll.u32 920167782, %v36
    %v52 = vshrl.u32 1326507024, %v37
    %v53 = vor.u32 %v51, %v52
    %vm54 = vcmp.lt.s32.totalorder %v35, 1
    %vm55 = vcmp.lt.s32.totalorder %v35, 2
    %vm56 = vcmp.lt.s32.totalorder %v35, 3
    %vm57 = vcmp.lt.s32.totalorder %v35, 4
    %v58 = vsel %vm54, %v38, %v41
    %v59 = vsel %vm57, %v47, 2102212464
    %v60 = vsel %vm56, %v44, %v59
    %v61 = vsel %vm55, %v58, %v60
    %v62 = vsel %vm54, %v41, %v44
    %v63 = vsel %vm57, %v50, 920167782
    %v64 = vsel %vm56, %v47, %v63
    %v65 = vsel %vm55, %v62, %v64
    %v66 = vsel %vm54, %v44, %v47
    %v67 = vsel %vm57, %v53, 1326507024
    %v68 = vsel %vm56, %v50, %v67
    %v69 = vsel %vm55, %v66, %v68
    %v70 = vshll.u32 %v30, 8
    %v71 = vmul.u32.u64.compose %v70, %v69
    %v72 = vextract.low.u32 %v71
    %v73 = vextract.high.u32 %v71
    %v74 = vmul.u32.u64.compose %v70, %v65
    %v75 = vextract.low.u32 %v74
    %v76 = vextract.high.u32 %v74
    %v77 = vmul.u32 %v70, %v61
    %v78 = vadd.s32 %v73, %v75
    %vm79 = vc.u32 %v73, %v75
    %v80 = vadd.s32 %v76, 1
    %v81 = vsel %vm79, %v80, %v76
    %v82 = vadd.s32 %v77, %v81
    %v83 = vadd.s32 %v82, 536870912
    %v84 = vshrl.u32 %v83, 30
    %v85 = vshll.u32 %v84, 30
    %v86 = vsub.s32 %v82, %v85
    %vm87 = vcmp.lt.s32.totalorder %v86, 0
    %v88 = vsub.s32 0, %v86
    %v89 = vsel %vm87, %v88, %v86
    %v90 = vclz %v89
    %v91 = vsub.s32 %v90, 2
    %vm92 = vcmp.gt.s32.totalorder 0, %v91
    %v93 = vsel %vm92, 0, %v91
    %v94 = vsub.s32 32, %v93
    %v95 = vshll.u32 %v86, %v93
    %v96 = vshrl.u32 %v78, %v94
    %v97 = vor.u32 %v95, %v96
    %v98 = vsub.s32 4294967266, %v93
    %v99 = vadd.s32 %v98, 127
    %v100 = vshll.u32 %v99, 23
    %v101 = vor.u32 4788187, %v100
    %v102 = vand.u32 2147483647, %v101
    %v104 = vcvt.s32.f32 %v97
    %v105 = vmul.f32 %v104, %v102
    %v106 = vxor.u32 %v105, 2147483648
    %v107 = vsel %vm24, %v106, %v105
    %v108 = vsub.s32 4, %v84
    %v109 = vsel %vm24, %v108, %v84
    %v110 = vsel %vm23, %v21, %v107
    %v111 = vsel %vm23, 0, %v109
    %v112 = vcosq.f32.pop %v110
    %v113 = vsinq.f32.pop %v110
    %vm114 = vweird.f32 %v21
    %v115 = vadd.s32 %v111, 3
    %v116 = vand.u32 %v115, 3
    %vm117 = vcmp.lt.s32.totalorder %v116, 2
    %vm118 = vcmp.eq.s32.totalorder %v116, 0
    %v119 = vxor.u32 %v113, 2147483648
    %v120 = vsel %vm118, %v112, %v119
    %vm121 = vcmp.eq.s32.totalorder %v116, 2
    %v122 = vxor.u32 %v112, 2147483648
    %v123 = vsel %vm121, %v122, %v113
    %v124 = vsel %vm117, %v120, %v123
    %v125 = vsel %vm114, nan, %v124
    %v126 = vand.u32 2147483647, %v21
    %vm127 = vcmp.le.f32.partialorder %v126, 0.7853982
    %vm128 = vcmp.lt.s32.totalorder %v21, 0
    %v129 = vand.u32 %v21, 2139095040
    %v130 = vshrl.u32 %v129, 23
    %v131 = vsub.s32 %v130, 127
    %v132 = vand.u32 2147483647, %v21
    %v133 = vand.u32 %v132, 8388607
    %v134 = vor.u32 %v133, 8388608
    %v135 = vsub.s32 0, %v134
    %v136 = vadd.s32 %v131, 1
    %vm137 = vcmp.gt.s32.totalorder %v136, 0
    %v138 = vsel %vm137, %v136, 0
    %v139 = vshrl.u32 %v138, 5
    %v140 = vand.u32 %v138, 31
    %v141 = vsub.s32 32, %v140
    %v142 = vshrl.u32 683565275, %v141
    %v143 = vshll.u32 683565275, %v140
    %v144 = vshrl.u32 2475754826, %v141
    %v145 = vor.u32 %v143, %v144
    %v146 = vshll.u32 2475754826, %v140
    %v147 = vshrl.u32 2131351028, %v141
    %v148 = vor.u32 %v146, %v147
    %v149 = vshll.u32 2131351028, %v140
    %v150 = vshrl.u32 2102212464, %v141
    %v151 = vor.u32 %v149, %v150
    %v152 = vshll.u32 2102212464, %v140
    %v153 = vshrl.u32 920167782, %v141
    %v154 = vor.u32 %v152, %v153
    %v155 = vshll.u32 920167782, %v140
    %v156 = vshrl.u32 1326507024, %v141
    %v157 = vor.u32 %v155, %v156
    %vm158 = vcmp.lt.s32.totalorder %v139, 1
    %vm159 = vcmp.lt.s32.totalorder %v139, 2
    %vm160 = vcmp.lt.s32.totalorder %v139, 3
    %vm161 = vcmp.lt.s32.totalorder %v139, 4
    %v162 = vsel %vm158, %v142, %v145
    %v163 = vsel %vm161, %v151, 2102212464
    %v164 = vsel %vm160, %v148, %v163
    %v165 = vsel %vm159, %v162, %v164
    %v166 = vsel %vm158, %v145, %v148
    %v167 = vsel %vm161, %v154, 920167782
    %v168 = vsel %vm160, %v151, %v167
    %v169 = vsel %vm159, %v166, %v168
    %v170 = vsel %vm158, %v148, %v151
    %v171 = vsel %vm161, %v157, 1326507024
    %v172 = vsel %vm160, %v154, %v171
    %v173 = vsel %vm159, %v170, %v172
    %v174 = vshll.u32 %v134, 8
    %v175 = vmul.u32.u64.compose %v174, %v173
    %v176 = vextract.low.u32 %v175
    %v177 = vextract.high.u32 %v175
    %v178 = vmul.u32.u64.compose %v174, %v169
    %v179 = vextract.low.u32 %v178
    %v180 = vextract.high.u32 %v178
    %v181 = vmul.u32 %v174, %v165
    %v182 = vadd.s32 %v177, %v179
    %vm183 = vc.u32 %v177, %v179
    %v184 = vadd.s32 %v180, 1
    %v185 = vsel %vm183, %v184, %v180
    %v186 = vadd.s32 %v181, %v185
    %v187 = vadd.s32 %v186, 536870912
    %v188 = vshrl.u32 %v187, 30
    %v189 = vshll.u32 %v188, 30
    %v190 = vsub.s32 %v186, %v189
    %vm191 = vcmp.lt.s32.totalorder %v190, 0
    %v192 = vsub.s32 0, %v190
    %v193 = vsel %vm191, %v192, %v190
    %v194 = vclz %v193
    %v195 = vsub.s32 %v194, 2
    %vm196 = vcmp.gt.s32.totalorder 0, %v195
    %v197 = vsel %vm196, 0, %v195
    %v198 = vsub.s32 32, %v197
    %v199 = vshll.u32 %v190, %v197
    %v200 = vshrl.u32 %v182, %v198
    %v201 = vor.u32 %v199, %v200
    %v202 = vsub.s32 4294967266, %v197
    %v203 = vadd.s32 %v202, 127
    %v204 = vshll.u32 %v203, 23
    %v205 = vor.u32 4788187, %v204
    %v206 = vand.u32 2147483647, %v205
    %v208 = vcvt.s32.f32 %v201
    %v209 = vmul.f32 %v208, %v206
    %v210 = vxor.u32 %v209, 2147483648
    %v211 = vsel %vm128, %v210, %v209
    %v212 = vsub.s32 4, %v188
    %v213 = vsel %vm128, %v212, %v188
    %v214 = vsel %vm127, %v21, %v211
    %v215 = vsel %vm127, 0, %v213
    %v216 = vcosq.f32.pop %v214
    %v217 = vsinq.f32.pop %v214
    %vm218 = vweird.f32 %v21
    %v219 = vand.u32 %v215, 3
    %vm220 = vcmp.lt.s32.totalorder %v219, 2
    %vm221 = vcmp.eq.s32.totalorder %v219, 0
    %v222 = vxor.u32 %v217, 2147483648
    %v223 = vsel %vm221, %v216, %v222
    %vm224 = vcmp.eq.s32.totalorder %v219, 2
    %v225 = vxor.u32 %v216, 2147483648
    %v226 = vsel %vm224, %v225, %v217
    %v227 = vsel %vm220, %v223, %v226
    %v228 = vsel %vm218, nan, %v227
    %v230 = vcombine.high %v21, %v21
    %v233 = vcombine.low %v125, %v125
    %vm235 = vcmask 1043456
    %v236 = vsel %vm235, %v21, %v233
    %v237 = vsel %vm235, %v230, %v125
    %238 = vst [vmem:[#allocation5] sm:$0xff] %v236
    %239 = vst [vmem:[#allocation5 + $0x8] sm:$0xff] %v237
    %v240 = vmul.f32 %v125, 2.0
    %v241 = vmul.f32 %v240, %v228
    %v242 = vmul.f32 %v240, %v125
    %v243 = vsub.f32 1.0, %v242
    %v245 = vcombine.high %v228, %v228
    %v248 = vcombine.low %v241, %v241
    %v250 = vsel %vm235, %v228, %v248
    %v251 = vsel %vm235, %v245, %v241
    %252 = vst [vmem:[#allocation5 + $0x10] sm:$0xff] %v250
    %253 = vst [vmem:[#allocation5 + $0x18] sm:$0xff] %v251
    %v254 = vmul.f32 %v241, 2.0
    %v255 = vmul.f32 %v254, %v243
    %v256 = vmul.f32 %v254, %v241
    %v257 = vsub.f32 1.0, %v256
    %v259 = vcombine.high %v243, %v243
    %v262 = vcombine.low %v255, %v255
    %v264 = vsel %vm235, %v243, %v262
    %v265 = vsel %vm235, %v259, %v255
    %266 = vst [vmem:[#allocation5 + $0x20] sm:$0xff] %v264
    %267 = vst [vmem:[#allocation5 + $0x28] sm:$0xff] %v265
    %v268 = vmul.f32 %v21, 8.0
    %v269 = vand.u32 2147483647, %v268
    %vm270 = vcmp.le.f32.partialorder %v269, 0.7853982
    %vm271 = vcmp.lt.s32.totalorder %v268, 0
    %v272 = vand.u32 %v268, 2139095040
    %v273 = vshrl.u32 %v272, 23
    %v274 = vsub.s32 %v273, 127
    %v275 = vand.u32 2147483647, %v268
    %v276 = vand.u32 %v275, 8388607
    %v277 = vor.u32 %v276, 8388608
    %v278 = vsub.s32 0, %v277
    %v279 = vadd.s32 %v274, 1
    %vm280 = vcmp.gt.s32.totalorder %v279, 0
    %v281 = vsel %vm280, %v279, 0
    %v282 = vshrl.u32 %v281, 5
    %v283 = vand.u32 %v281, 31
    %v284 = vsub.s32 32, %v283
    %v285 = vshrl.u32 683565275, %v284
    %v286 = vshll.u32 683565275, %v283
    %v287 = vshrl.u32 2475754826, %v284
    %v288 = vor.u32 %v286, %v287
    %v289 = vshll.u32 2475754826, %v283
    %v290 = vshrl.u32 2131351028, %v284
    %v291 = vor.u32 %v289, %v290
    %v292 = vshll.u32 2131351028, %v283
    %v293 = vshrl.u32 2102212464, %v284
    %v294 = vor.u32 %v292, %v293
    %v295 = vshll.u32 2102212464, %v283
    %v296 = vshrl.u32 920167782, %v284
    %v297 = vor.u32 %v295, %v296
    %v298 = vshll.u32 920167782, %v283
    %v299 = vshrl.u32 1326507024, %v284
    %v300 = vor.u32 %v298, %v299
    %vm301 = vcmp.lt.s32.totalorder %v282, 1
    %vm302 = vcmp.lt.s32.totalorder %v282, 2
    %vm303 = vcmp.lt.s32.totalorder %v282, 3
    %vm304 = vcmp.lt.s32.totalorder %v282, 4
    %v305 = vsel %vm301, %v285, %v288
    %v306 = vsel %vm304, %v294, 2102212464
    %v307 = vsel %vm303, %v291, %v306
    %v308 = vsel %vm302, %v305, %v307
    %v309 = vsel %vm301, %v288, %v291
    %v310 = vsel %vm304, %v297, 920167782
    %v311 = vsel %vm303, %v294, %v310
    %v312 = vsel %vm302, %v309, %v311
    %v313 = vsel %vm301, %v291, %v294
    %v314 = vsel %vm304, %v300, 1326507024
    %v315 = vsel %vm303, %v297, %v314
    %v316 = vsel %vm302, %v313, %v315
    %v317 = vshll.u32 %v277, 8
    %v318 = vmul.u32.u64.compose %v317, %v316
    %v319 = vextract.low.u32 %v318
    %v320 = vextract.high.u32 %v318
    %v321 = vmul.u32.u64.compose %v317, %v312
    %v322 = vextract.low.u32 %v321
    %v323 = vextract.high.u32 %v321
    %v324 = vmul.u32 %v317, %v308
    %v325 = vadd.s32 %v320, %v322
    %vm326 = vc.u32 %v320, %v322
    %v327 = vadd.s32 %v323, 1
    %v328 = vsel %vm326, %v327, %v323
    %v329 = vadd.s32 %v324, %v328
    %v330 = vadd.s32 %v329, 536870912
    %v331 = vshrl.u32 %v330, 30
    %v332 = vshll.u32 %v331, 30
    %v333 = vsub.s32 %v329, %v332
    %vm334 = vcmp.lt.s32.totalorder %v333, 0
    %v335 = vsub.s32 0, %v333
    %v336 = vsel %vm334, %v335, %v333
    %v337 = vclz %v336
    %v338 = vsub.s32 %v337, 2
    %vm339 = vcmp.gt.s32.totalorder 0, %v338
    %v340 = vsel %vm339, 0, %v338
    %v341 = vsub.s32 32, %v340
    %v342 = vshll.u32 %v333, %v340
    %v343 = vshrl.u32 %v325, %v341
    %v344 = vor.u32 %v342, %v343
    %v345 = vsub.s32 4294967266, %v340
    %v346 = vadd.s32 %v345, 127
    %v347 = vshll.u32 %v346, 23
    %v348 = vor.u32 4788187, %v347
    %v349 = vand.u32 2147483647, %v348
    %v351 = vcvt.s32.f32 %v344
    %v352 = vmul.f32 %v351, %v349
    %v353 = vxor.u32 %v352, 2147483648
    %v354 = vsel %vm271, %v353, %v352
    %v355 = vsub.s32 4, %v331
    %v356 = vsel %vm271, %v355, %v331
    %v357 = vsel %vm270, %v268, %v354
    %v358 = vsel %vm270, 0, %v356
    %v359 = vcosq.f32.pop %v357
    %v360 = vsinq.f32.pop %v357
    %vm361 = vweird.f32 %v268
    %v362 = vadd.s32 %v358, 3
    %v363 = vand.u32 %v362, 3
    %vm364 = vcmp.lt.s32.totalorder %v363, 2
    %vm365 = vcmp.eq.s32.totalorder %v363, 0
    %v366 = vxor.u32 %v360, 2147483648
    %v367 = vsel %vm365, %v359, %v366
    %vm368 = vcmp.eq.s32.totalorder %v363, 2
    %v369 = vxor.u32 %v359, 2147483648
    %v370 = vsel %vm368, %v369, %v360
    %v371 = vsel %vm364, %v367, %v370
    %v372 = vsel %vm361, nan, %v371
    %v373 = vand.u32 2147483647, %v268
    %vm374 = vcmp.le.f32.partialorder %v373, 0.7853982
    %vm375 = vcmp.lt.s32.totalorder %v268, 0
    %v376 = vand.u32 %v268, 2139095040
    %v377 = vshrl.u32 %v376, 23
    %v378 = vsub.s32 %v377, 127
    %v379 = vand.u32 2147483647, %v268
    %v380 = vand.u32 %v379, 8388607
    %v381 = vor.u32 %v380, 8388608
    %v382 = vsub.s32 0, %v381
    %v383 = vadd.s32 %v378, 1
    %vm384 = vcmp.gt.s32.totalorder %v383, 0
    %v385 = vsel %vm384, %v383, 0
    %v386 = vshrl.u32 %v385, 5
    %v387 = vand.u32 %v385, 31
    %v388 = vsub.s32 32, %v387
    %v389 = vshrl.u32 683565275, %v388
    %v390 = vshll.u32 683565275, %v387
    %v391 = vshrl.u32 2475754826, %v388
    %v392 = vor.u32 %v390, %v391
    %v393 = vshll.u32 2475754826, %v387
    %v394 = vshrl.u32 2131351028, %v388
    %v395 = vor.u32 %v393, %v394
    %v396 = vshll.u32 2131351028, %v387
    %v397 = vshrl.u32 2102212464, %v388
    %v398 = vor.u32 %v396, %v397
    %v399 = vshll.u32 2102212464, %v387
    %v400 = vshrl.u32 920167782, %v388
    %v401 = vor.u32 %v399, %v400
    %v402 = vshll.u32 920167782, %v387
    %v403 = vshrl.u32 1326507024, %v388
    %v404 = vor.u32 %v402, %v403
    %vm405 = vcmp.lt.s32.totalorder %v386, 1
    %vm406 = vcmp.lt.s32.totalorder %v386, 2
    %vm407 = vcmp.lt.s32.totalorder %v386, 3
    %vm408 = vcmp.lt.s32.totalorder %v386, 4
    %v409 = vsel %vm405, %v389, %v392
    %v410 = vsel %vm408, %v398, 2102212464
    %v411 = vsel %vm407, %v395, %v410
    %v412 = vsel %vm406, %v409, %v411
    %v413 = vsel %vm405, %v392, %v395
    %v414 = vsel %vm408, %v401, 920167782
    %v415 = vsel %vm407, %v398, %v414
    %v416 = vsel %vm406, %v413, %v415
    %v417 = vsel %vm405, %v395, %v398
    %v418 = vsel %vm408, %v404, 1326507024
    %v419 = vsel %vm407, %v401, %v418
    %v420 = vsel %vm406, %v417, %v419
    %v421 = vshll.u32 %v381, 8
    %v422 = vmul.u32.u64.compose %v421, %v420
    %v423 = vextract.low.u32 %v422
    %v424 = vextract.high.u32 %v422
    %v425 = vmul.u32.u64.compose %v421, %v416
    %v426 = vextract.low.u32 %v425
    %v427 = vextract.high.u32 %v425
    %v428 = vmul.u32 %v421, %v412
    %v429 = vadd.s32 %v424, %v426
    %vm430 = vc.u32 %v424, %v426
    %v431 = vadd.s32 %v427, 1
    %v432 = vsel %vm430, %v431, %v427
    %v433 = vadd.s32 %v428, %v432
    %v434 = vadd.s32 %v433, 536870912
    %v435 = vshrl.u32 %v434, 30
    %v436 = vshll.u32 %v435, 30
    %v437 = vsub.s32 %v433, %v436
    %vm438 = vcmp.lt.s32.totalorder %v437, 0
    %v439 = vsub.s32 0, %v437
    %v440 = vsel %vm438, %v439, %v437
    %v441 = vclz %v440
    %v442 = vsub.s32 %v441, 2
    %vm443 = vcmp.gt.s32.totalorder 0, %v442
    %v444 = vsel %vm443, 0, %v442
    %v445 = vsub.s32 32, %v444
    %v446 = vshll.u32 %v437, %v444
    %v447 = vshrl.u32 %v429, %v445
    %v448 = vor.u32 %v446, %v447
    %v449 = vsub.s32 4294967266, %v444
    %v450 = vadd.s32 %v449, 127
    %v451 = vshll.u32 %v450, 23
    %v452 = vor.u32 4788187, %v451
    %v453 = vand.u32 2147483647, %v452
    %v455 = vcvt.s32.f32 %v448
    %v456 = vmul.f32 %v455, %v453
    %v457 = vxor.u32 %v456, 2147483648
    %v458 = vsel %vm375, %v457, %v456
    %v459 = vsub.s32 4, %v435
    %v460 = vsel %vm375, %v459, %v435
    %v461 = vsel %vm374, %v268, %v458
    %v462 = vsel %vm374, 0, %v460
    %v463 = vcosq.f32.pop %v461
    %v464 = vsinq.f32.pop %v461
    %vm465 = vweird.f32 %v268
    %v466 = vand.u32 %v462, 3
    %vm467 = vcmp.lt.s32.totalorder %v466, 2
    %vm468 = vcmp.eq.s32.totalorder %v466, 0
    %v469 = vxor.u32 %v464, 2147483648
    %v470 = vsel %vm468, %v463, %v469
    %vm471 = vcmp.eq.s32.totalorder %v466, 2
    %v472 = vxor.u32 %v463, 2147483648
    %v473 = vsel %vm471, %v472, %v464
    %v474 = vsel %vm467, %v470, %v473
    %v475 = vsel %vm465, nan, %v474
    %v477 = vcombine.high %v257, %v257
    %v480 = vcombine.low %v372, %v372
    %v482 = vsel %vm235, %v257, %v480
    %v483 = vsel %vm235, %v477, %v372
    %484 = vst [vmem:[#allocation5 + $0x30] sm:$0xff] %v482
    %485 = vst [vmem:[#allocation5 + $0x38] sm:$0xff] %v483
    %v487 = vcombine.high %v475, %v475
    %489 = vst [vmem:[#allocation5 + $0x40] sm:$0xf] %v475
    %490 = vst [vmem:[#allocation5 + $0x48] sm:$0xf] %v487
    // Predicated region
    $region10: #{tpu_custom_call.1} parent=1 // pred_check
      _
    $region11: #{tpu_custom_call.1} parent=1 // pred_check_branch
      %492 = sbr.rel (0) target = $region13
    $region12: #{tpu_custom_call.1} parent=1 // pred_region
      %s494 = ssub.s32 1280, 1280
      %495 = vsyncadd [#allocation4], %s494
      %s496 = sshll.u32 [#allocation5], 4
      %s497 = int_to_ptr.vmem [resolvable:$true] %s496
      %502 = dma.vmem_to_hbm [thread:$0]  %s497, 1280, %s1, [#allocation4], 256, 256, 16
    $region13: #{tpu_custom_call.1} parent=1 // pred_fallthru
      _
    // Predicated region
    $region14: #{tpu_custom_call.1} parent=1 // pred_check
      _
    $region15: #{tpu_custom_call.1} parent=1 // pred_check_branch
      %504 = sbr.rel (0) target = $region17
    $region16: #{tpu_custom_call.1} parent=1 // pred_region
      %505 = dma.done [#allocation4], 1280
    $region17: #{tpu_custom_call.1} parent=1 // pred_fallthru
      _
    %506 = vsyncpa [#allocation3], 1
    %507 = vsyncpa [#allocation4], 1

</llo_original>
